<compile_context>
chip_gen: v6e
topology: v6e:2x2x1
jax: 0.10.0
libtpu: 0.0.40
codegen_flags: <defaults>
</compile_context>

<pallas_src>
import functools

import jax
import jax.numpy as jnp
from jax import lax
from jax.experimental import pallas as pl
from jax.experimental.pallas import tpu as pltpu


_PAD = 128  # lane-aligned leading pad per element; also absorbs the max tap
            # shift (W + 1), valid for any W <= 127.


def _basic_block_kernel(x_ref, w1_ref, b1_ref, w2_ref, b2_ref, out_ref,
                        pad_ref, patch_ref, *, H, W, B):
    """Fused conv1->bn1->relu->conv2->bn2->(+residual)->relu for B elements.

    x_ref    : (B, C, H*W)            f32  input / residual (NCHW flattened)
    w1_ref   : (C, 9*C)               bf16 conv1 weights (taps on K, BN1 folded)
    b1_ref   : (C, 1)                 f32  BN1 folded bias
    w2_ref   : (C, 9*C)               bf16 conv2 weights (BN2 folded)
    b2_ref   : (C, 1)                 f32  BN2 folded bias
    out_ref  : (B, C, H*W)            f32
    pad_ref  : VMEM (C, B*(H*W+128)+128) bf16  zero-extended input (reused by both convs)
    patch_ref: VMEM (9*C, B*H*W)         bf16  im2col patch (9 taps stacked on sublanes)
    """
    HW = H * W
    SEG = HW + _PAD
    C = x_ref.shape[1]

    # Column masks killing the row wrap-around of the +/-1 lane shifts.
    # Hoisted: one broadcast each, reused by every masked tap of both convs.
    col = lax.broadcasted_iota(jnp.int32, (1, HW), 1) % W
    not_left = jnp.broadcast_to(col != 0, (C, HW))       # dx==0 invalid at w==0
    not_right = jnp.broadcast_to(col != W - 1, (C, HW))  # dx==2 invalid at w==W-1

    # Zero the padded buffer once per grid step.  Only interiors are written
    # below, so the borders / inter-element gaps stay zero for both convs, and
    # the scratch is fully re-initialised every step (safe under megacore
    # "parallel" sharding).
    pad_ref[...] = jnp.zeros_like(pad_ref)

    def write_interiors(get_elem):
        for b in range(B):
            base = _PAD + b * SEG                      # 128-aligned interior start
            pad_ref[:, base:base + HW] = get_elem(b).astype(pad_ref.dtype)

    def build_patch():
        # im2col over the 9 taps: each tap is a contiguous lane-offset slice of
        # the zero-extended buffer (row shifts fall into the zero gaps); the
        # column masks are applied while writing the patch.
        for dy in range(3):
            for dx in range(3):
                t = dy * 3 + dx
                s = (dy - 1) * W + (dx - 1)
                for b in range(B):
                    start = _PAD + b * SEG + s
                    sl = pad_ref[:, start:start + HW]
                    if dx == 0:
                        sl = jnp.where(not_left, sl, jnp.zeros_like(sl))
                    elif dx == 2:
                        sl = jnp.where(not_right, sl, jnp.zeros_like(sl))
                    patch_ref[t * C:(t + 1) * C, b * HW:(b + 1) * HW] = sl

    def conv(w_ref, bias_ref):
        # Single K = 9*C matmul per conv: bf16 operands, f32 accumulation.
        return jnp.dot(w_ref[...], patch_ref[...],
                       preferred_element_type=jnp.float32) + bias_ref[...]

    # ---- conv1 (BN1 scale folded) + bias + relu ----
    write_interiors(lambda b: x_ref[b])
    build_patch()
    y1 = jnp.maximum(conv(w1_ref, b1_ref), 0.0)          # (C, B*HW) f32

    # ---- conv2 (BN2 scale folded) + bias + residual + relu ----
    write_interiors(lambda b: y1[:, b * HW:(b + 1) * HW])
    build_patch()
    y2 = conv(w2_ref, b2_ref)                            # (C, B*HW) f32
    for b in range(B):
        res = y2[:, b * HW:(b + 1) * HW] + x_ref[b]      # residual add in f32
        out_ref[b] = jnp.maximum(res, 0.0).astype(out_ref.dtype)


def _pick_batch_block(N, C, HW):
    """Batch elements per grid step: amortize per-step overhead, keep >= 2 grid
    steps (feed both v7x TensorCores), and bound the im2col scratch (~4 MiB)."""
    patch_bytes_per_elem = 9 * C * HW * 2                 # bf16
    cap = max(1, (4 * 1024 * 1024) // patch_bytes_per_elem)
    best = 1
    for cand in range(1, N + 1):
        if N % cand == 0 and cand <= cap and (N // cand >= 2 or N == 1):
            best = cand
    return best


@functools.partial(jax.jit, static_argnames=("batch_block",))
def basic_block_forward(x_nchw, w1, s1, b1, w2, s2, b2, batch_block=None):
    """x_nchw: (N, C, H, W) f32 (PyTorch layout).  Returns (N, C, H, W) f32.

    w1, w2: (3, 3, Cin, Cout) HWIO conv weights.
    s*, b*: folded inference-mode BatchNorm scale / bias (per output channel).
    """
    N, C, H, W = x_nchw.shape
    HW = H * W
    Cout = w1.shape[3]
    assert w1.shape == (3, 3, C, Cout) and w2.shape == (3, 3, Cout, Cout)
    assert Cout == C, "residual add requires inplanes == planes (no downsample)"
    assert W + 1 <= _PAD, "kernel assumes W + 1 <= 128"

    B = _pick_batch_block(N, C, HW) if batch_block is None else batch_block
    assert N % B == 0
    SEG = HW + _PAD

    # Fold BN scale into the conv weights in f32 (conv is linear), then cast to
    # bf16.  Layout (Cout, 9*Cin) with K index = (dy*3+dx)*Cin + cin, matching
    # the im2col patch row order.
    def fold(w, s):
        return (jnp.transpose(w * s[None, None, None, :], (3, 0, 1, 2))
                .reshape(w.shape[3], 9 * w.shape[2]).astype(jnp.bfloat16))

    w1t = fold(w1, s1)
    w2t = fold(w2, s2)
    b1c = b1.reshape(Cout, 1).astype(jnp.float32)
    b2c = b2.reshape(Cout, 1).astype(jnp.float32)

    x_flat = x_nchw.reshape(N, C, HW)                     # free reshape, no transpose

    out_flat = pl.pallas_call(
        functools.partial(_basic_block_kernel, H=H, W=W, B=B),
        out_shape=jax.ShapeDtypeStruct((N, Cout, HW), x_nchw.dtype),
        grid_spec=pltpu.PrefetchScalarGridSpec(
            num_scalar_prefetch=0,
            grid=(N // B,),
            in_specs=[
                pl.BlockSpec((B, C, HW), lambda n: (n, 0, 0)),
                pl.BlockSpec((Cout, 9 * C), lambda n: (0, 0)),   # constant index_map:
                pl.BlockSpec((Cout, 1), lambda n: (0, 0)),       #  weights not re-DMA'd
                pl.BlockSpec((Cout, 9 * C), lambda n: (0, 0)),
                pl.BlockSpec((Cout, 1), lambda n: (0, 0)),
            ],
            out_specs=pl.BlockSpec((B, Cout, HW), lambda n: (n, 0, 0)),
            scratch_shapes=[
                pltpu.VMEM((C, B * SEG + _PAD), jnp.bfloat16),   # zero-extended buffer
                pltpu.VMEM((9 * C, B * HW), jnp.bfloat16),       # im2col patch
            ],
        ),
        compiler_params=pltpu.CompilerParams(
            dimension_semantics=("parallel",)),
        # Blocks are tiny here; set vmem_limit_bytes explicitly if B / channels
        # are scaled up (v7x has 64 MiB physical, v5e's scoped default is 16 MiB).
    )(x_flat, w1t, b1c, w2t, b2c)

    return out_flat.reshape(N, Cout, H, W)


def _reference_forward(x_nchw, w1, s1, b1, w2, s2, b2, match_kernel_precision=False):
    """Plain-JAX reference (NHWC convs).  With match_kernel_precision=True the
    conv operands are rounded to bf16 exactly like the kernel does."""
    rnd = ((lambda a: a.astype(jnp.bfloat16).astype(jnp.float32))
           if match_kernel_precision else (lambda a: a))
    x = jnp.transpose(x_nchw, (0, 2, 3, 1))
    dn = ("NHWC", "HWIO", "NHWC")
    w1f = rnd(w1 * s1[None, None, None, :])
    w2f = rnd(w2 * s2[None, None, None, :])
    y = lax.conv_general_dilated(rnd(x), w1f, (1, 1), "SAME", dimension_numbers=dn,
                                 precision=lax.Precision.HIGHEST)
    y = jnp.maximum(y + b1, 0.0)
    y = lax.conv_general_dilated(rnd(y), w2f, (1, 1), "SAME", dimension_numbers=dn,
                                 precision=lax.Precision.HIGHEST)
    y = y + b2 + x
    return jnp.transpose(jnp.maximum(y, 0.0), (0, 3, 1, 2))


def _make_inputs(key, N, C, H, W):
    planes = C  # residual add requires inplanes == planes when downsample is None
    k = jax.random.split(key, 11)
    x = jax.random.normal(k[0], (N, C, H, W), jnp.float32)
    w1 = jax.random.normal(k[1], (3, 3, C, planes), jnp.float32) * 0.1
    w2 = jax.random.normal(k[2], (3, 3, planes, planes), jnp.float32) * 0.1
    eps = 1e-5
    gamma1 = 1.0 + 0.1 * jax.random.normal(k[3], (planes,), jnp.float32)
    beta1 = 0.1 * jax.random.normal(k[4], (planes,), jnp.float32)
    mean1 = 0.1 * jax.random.normal(k[5], (planes,), jnp.float32)
    var1 = jnp.abs(1.0 + 0.1 * jax.random.normal(k[6], (planes,), jnp.float32))
    gamma2 = 1.0 + 0.1 * jax.random.normal(k[7], (planes,), jnp.float32)
    beta2 = 0.1 * jax.random.normal(k[8], (planes,), jnp.float32)
    mean2 = 0.1 * jax.random.normal(k[9], (planes,), jnp.float32)
    var2 = jnp.abs(1.0 + 0.1 * jax.random.normal(k[10], (planes,), jnp.float32))
    s1 = gamma1 / jnp.sqrt(var1 + eps)
    b1 = beta1 - mean1 * s1
    s2 = gamma2 / jnp.sqrt(var2 + eps)
    b2 = beta2 - mean2 * s2
    return x, w1, s1, b1, w2, s2, b2


if __name__ == "__main__":
    key = jax.random.PRNGKey(0)
    k1, k2 = jax.random.split(key)

    # Case 1: BasicBlock(8, 8), N=2  -> B=1 per step, 2 grid steps (megacore).
    # Case 2: N=4                    -> B=2 per step, exercises the batched path.
    for case_key, N in ((k1, 2), (k2, 4)):
        args = _make_inputs(case_key, N, 8, 16, 16)
        out = jax.block_until_ready(basic_block_forward(*args))
        assert out.shape == args[0].shape, out.shape

        ref_matched = _reference_forward(*args, match_kernel_precision=True)
        ref_f32 = _reference_forward(*args, match_kernel_precision=False)
        err_m = float(jnp.max(jnp.abs(out - ref_matched)))
        err_f = float(jnp.max(jnp.abs(out - ref_f32)))
        assert jnp.allclose(out, ref_matched, atol=1e-3, rtol=1e-3), \
            f"N={N}: precision-matched max abs err {err_m}"
        assert jnp.allclose(out, ref_f32, atol=5e-2, rtol=5e-2), \
            f"N={N}: f32-reference max abs err {err_f}"

    print("KERNEL_OK")
</pallas_src>

<mosaic_0001>
module attributes {stable_mosaic.version = 11 : i64} {
  func.func @_basic_block_kernel(%arg0: i32, %arg1: memref<1x8x256xf32, #tpu.memory_space<vmem>>, %arg2: memref<8x72xbf16, #tpu.memory_space<vmem>>, %arg3: memref<8x1xf32, #tpu.memory_space<vmem>>, %arg4: memref<8x72xbf16, #tpu.memory_space<vmem>>, %arg5: memref<8x1xf32, #tpu.memory_space<vmem>>, %arg6: memref<1x8x256xf32, #tpu.memory_space<vmem>>, %arg7: memref<8x512xbf16, #tpu.memory_space<vmem>>, %arg8: memref<72x256xbf16, #tpu.memory_space<vmem>>) attributes {dimension_semantics = [#tpu.dimension_semantics<parallel>], iteration_bounds = array<i64: 2>, scalar_prefetch = 0 : i64, scratch_operands = 2 : i64, tpu.core_type = #tpu.core_type<tc>, window_params = [{transform_indices = @transform_0, window_bounds = array<i64: 1, 8, 256>}, {pipeline_mode = #tpu.pipeline_mode<synchronous>, transform_indices = @transform_1, window_bounds = array<i64: 8, 72>}, {pipeline_mode = #tpu.pipeline_mode<synchronous>, transform_indices = @transform_2, window_bounds = array<i64: 8, 1>}, {pipeline_mode = #tpu.pipeline_mode<synchronous>, transform_indices = @transform_3, window_bounds = array<i64: 8, 72>}, {pipeline_mode = #tpu.pipeline_mode<synchronous>, transform_indices = @transform_4, window_bounds = array<i64: 8, 1>}, {transform_indices = @transform_5, window_bounds = array<i64: 1, 8, 256>}]} {
    %0 = tpu.iota {dimensions = array<i32: 1>} : vector<1x256xi32>
    %c16_i32 = arith.constant 16 : i32
    %c0_i32 = arith.constant 0 : i32
    %1 = arith.cmpi eq, %c16_i32, %c0_i32 : i32
    %c1_i32 = arith.constant 1 : i32
    %2 = arith.select %1, %c1_i32, %c16_i32 : i32
    %3 = vector.broadcast %2 : i32 to vector<1x256xi32>
    %4 = arith.remsi %0, %3 : vector<1x256xi32>
    %c0_i32_0 = arith.constant 0 : i32
    %5 = vector.broadcast %c0_i32_0 : i32 to vector<1x256xi32>
    %6 = arith.cmpi ne, %4, %5 : vector<1x256xi32>
    %c0_i32_1 = arith.constant 0 : i32
    %7 = vector.broadcast %c0_i32_1 : i32 to vector<1x256xi32>
    %8 = arith.cmpi slt, %4, %7 : vector<1x256xi32>
    %c0_i32_2 = arith.constant 0 : i32
    %9 = arith.cmpi slt, %2, %c0_i32_2 : i32
    %10 = vector.broadcast %9 : i1 to vector<1x256xi1>
    %11 = vector.broadcast %10 : vector<1x256xi1> to vector<1x256xi1>
    %12 = arith.xori %8, %11 : vector<1x256xi1>
    %13 = arith.andi %12, %6 : vector<1x256xi1>
    %14 = vector.broadcast %2 : i32 to vector<1x256xi32>
    %15 = arith.addi %4, %14 : vector<1x256xi32>
    %16 = arith.select %13, %15, %4 : vector<1x256xi1>, vector<1x256xi32>
    %c0_i32_3 = arith.constant 0 : i32
    %17 = vector.broadcast %c0_i32_3 : i32 to vector<1x256xi32>
    %18 = arith.cmpi ne, %16, %17 : vector<1x256xi32>
    %19 = vector.shape_cast %18 : vector<1x256xi1> to vector<1x256xi1>
    %20 = vector.broadcast %19 : vector<1x256xi1> to vector<8x256xi1>
    %c15_i32 = arith.constant 15 : i32
    %21 = vector.broadcast %c15_i32 : i32 to vector<1x256xi32>
    %22 = arith.cmpi ne, %16, %21 : vector<1x256xi32>
    %23 = vector.shape_cast %22 : vector<1x256xi1> to vector<1x256xi1>
    %24 = vector.broadcast %23 : vector<1x256xi1> to vector<8x256xi1>
    %cst = arith.constant 0.000000e+00 : bf16
    %25 = vector.broadcast %cst : bf16 to vector<8x512xbf16>
    %c0 = arith.constant 0 : index
    %c0_4 = arith.constant 0 : index
    %26 = vector.load %arg7[%c0, %c0_4] : memref<8x512xbf16, #tpu.memory_space<vmem>>, vector<8x512xbf16>
    tpu.vector_store %arg7[%c0, %c0_4], %25 {strides = array<i32>} : memref<8x512xbf16, #tpu.memory_space<vmem>>, vector<8x512xbf16>,
    %c0_5 = arith.constant 0 : index
    %c0_6 = arith.constant 0 : index
    %c0_7 = arith.constant 0 : index
    %27 = vector.load %arg1[%c0_5, %c0_6, %c0_7] : memref<1x8x256xf32, #tpu.memory_space<vmem>>, vector<1x8x256xf32>
    %28 = vector.shape_cast %27 : vector<1x8x256xf32> to vector<8x256xf32>
    %29 = arith.truncf %28 : vector<8x256xf32> to vector<8x256xbf16>
    %c0_8 = arith.constant 0 : index
    %c128 = arith.constant 128 : index
    %30 = vector.load %arg7[%c0_8, %c128] : memref<8x512xbf16, #tpu.memory_space<vmem>>, vector<8x256xbf16>
    tpu.vector_store %arg7[%c0_8, %c128], %29 {strides = array<i32>} : memref<8x512xbf16, #tpu.memory_space<vmem>>, vector<8x256xbf16>,
    %c0_9 = arith.constant 0 : index
    %c111 = arith.constant 111 : index
    %31 = vector.load %arg7[%c0_9, %c111] : memref<8x512xbf16, #tpu.memory_space<vmem>>, vector<8x256xbf16>
    %cst_10 = arith.constant 0.000000e+00 : bf16
    %32 = vector.broadcast %cst_10 : bf16 to vector<8x256xbf16>
    %33 = arith.select %20, %31, %32 : vector<8x256xi1>, vector<8x256xbf16>
    %c0_11 = arith.constant 0 : index
    %c0_12 = arith.constant 0 : index
    %34 = vector.load %arg8[%c0_11, %c0_12] : memref<72x256xbf16, #tpu.memory_space<vmem>>, vector<8x256xbf16>
    tpu.vector_store %arg8[%c0_11, %c0_12], %33 {strides = array<i32>} : memref<72x256xbf16, #tpu.memory_space<vmem>>, vector<8x256xbf16>,
    %c0_13 = arith.constant 0 : index
    %c112 = arith.constant 112 : index
    %35 = vector.load %arg7[%c0_13, %c112] : memref<8x512xbf16, #tpu.memory_space<vmem>>, vector<8x256xbf16>
    %c8 = arith.constant 8 : index
    %c0_14 = arith.constant 0 : index
    %36 = vector.load %arg8[%c8, %c0_14] : memref<72x256xbf16, #tpu.memory_space<vmem>>, vector<8x256xbf16>
    tpu.vector_store %arg8[%c8, %c0_14], %35 {strides = array<i32>} : memref<72x256xbf16, #tpu.memory_space<vmem>>, vector<8x256xbf16>,
    %c0_15 = arith.constant 0 : index
    %c113 = arith.constant 113 : index
    %37 = vector.load %arg7[%c0_15, %c113] : memref<8x512xbf16, #tpu.memory_space<vmem>>, vector<8x256xbf16>
    %cst_16 = arith.constant 0.000000e+00 : bf16
    %38 = vector.broadcast %cst_16 : bf16 to vector<8x256xbf16>
    %39 = arith.select %24, %37, %38 : vector<8x256xi1>, vector<8x256xbf16>
    %c16 = arith.constant 16 : index
    %c0_17 = arith.constant 0 : index
    %40 = vector.load %arg8[%c16, %c0_17] : memref<72x256xbf16, #tpu.memory_space<vmem>>, vector<8x256xbf16>
    tpu.vector_store %arg8[%c16, %c0_17], %39 {strides = array<i32>} : memref<72x256xbf16, #tpu.memory_space<vmem>>, vector<8x256xbf16>,
    %c0_18 = arith.constant 0 : index
    %c127 = arith.constant 127 : index
    %41 = vector.load %arg7[%c0_18, %c127] : memref<8x512xbf16, #tpu.memory_space<vmem>>, vector<8x256xbf16>
    %cst_19 = arith.constant 0.000000e+00 : bf16
    %42 = vector.broadcast %cst_19 : bf16 to vector<8x256xbf16>
    %43 = arith.select %20, %41, %42 : vector<8x256xi1>, vector<8x256xbf16>
    %c24 = arith.constant 24 : index
    %c0_20 = arith.constant 0 : index
    %44 = vector.load %arg8[%c24, %c0_20] : memref<72x256xbf16, #tpu.memory_space<vmem>>, vector<8x256xbf16>
    tpu.vector_store %arg8[%c24, %c0_20], %43 {strides = array<i32>} : memref<72x256xbf16, #tpu.memory_space<vmem>>, vector<8x256xbf16>,
    %c0_21 = arith.constant 0 : index
    %c128_22 = arith.constant 128 : index
    %45 = vector.load %arg7[%c0_21, %c128_22] : memref<8x512xbf16, #tpu.memory_space<vmem>>, vector<8x256xbf16>
    %c32 = arith.constant 32 : index
    %c0_23 = arith.constant 0 : index
    %46 = vector.load %arg8[%c32, %c0_23] : memref<72x256xbf16, #tpu.memory_space<vmem>>, vector<8x256xbf16>
    tpu.vector_store %arg8[%c32, %c0_23], %45 {strides = array<i32>} : memref<72x256xbf16, #tpu.memory_space<vmem>>, vector<8x256xbf16>,
    %c0_24 = arith.constant 0 : index
    %c129 = arith.constant 129 : index
    %47 = vector.load %arg7[%c0_24, %c129] : memref<8x512xbf16, #tpu.memory_space<vmem>>, vector<8x256xbf16>
    %cst_25 = arith.constant 0.000000e+00 : bf16
    %48 = vector.broadcast %cst_25 : bf16 to vector<8x256xbf16>
    %49 = arith.select %24, %47, %48 : vector<8x256xi1>, vector<8x256xbf16>
    %c40 = arith.constant 40 : index
    %c0_26 = arith.constant 0 : index
    %50 = vector.load %arg8[%c40, %c0_26] : memref<72x256xbf16, #tpu.memory_space<vmem>>, vector<8x256xbf16>
    tpu.vector_store %arg8[%c40, %c0_26], %49 {strides = array<i32>} : memref<72x256xbf16, #tpu.memory_space<vmem>>, vector<8x256xbf16>,
    %c0_27 = arith.constant 0 : index
    %c143 = arith.constant 143 : index
    %51 = vector.load %arg7[%c0_27, %c143] : memref<8x512xbf16, #tpu.memory_space<vmem>>, vector<8x256xbf16>
    %cst_28 = arith.constant 0.000000e+00 : bf16
    %52 = vector.broadcast %cst_28 : bf16 to vector<8x256xbf16>
    %53 = arith.select %20, %51, %52 : vector<8x256xi1>, vector<8x256xbf16>
    %c48 = arith.constant 48 : index
    %c0_29 = arith.constant 0 : index
    %54 = vector.load %arg8[%c48, %c0_29] : memref<72x256xbf16, #tpu.memory_space<vmem>>, vector<8x256xbf16>
    tpu.vector_store %arg8[%c48, %c0_29], %53 {strides = array<i32>} : memref<72x256xbf16, #tpu.memory_space<vmem>>, vector<8x256xbf16>,
    %c0_30 = arith.constant 0 : index
    %c144 = arith.constant 144 : index
    %55 = vector.load %arg7[%c0_30, %c144] : memref<8x512xbf16, #tpu.memory_space<vmem>>, vector<8x256xbf16>
    %c56 = arith.constant 56 : index
    %c0_31 = arith.constant 0 : index
    %56 = vector.load %arg8[%c56, %c0_31] : memref<72x256xbf16, #tpu.memory_space<vmem>>, vector<8x256xbf16>
    tpu.vector_store %arg8[%c56, %c0_31], %55 {strides = array<i32>} : memref<72x256xbf16, #tpu.memory_space<vmem>>, vector<8x256xbf16>,
    %c0_32 = arith.constant 0 : index
    %c145 = arith.constant 145 : index
    %57 = vector.load %arg7[%c0_32, %c145] : memref<8x512xbf16, #tpu.memory_space<vmem>>, vector<8x256xbf16>
    %cst_33 = arith.constant 0.000000e+00 : bf16
    %58 = vector.broadcast %cst_33 : bf16 to vector<8x256xbf16>
    %59 = arith.select %24, %57, %58 : vector<8x256xi1>, vector<8x256xbf16>
    %c64 = arith.constant 64 : index
    %c0_34 = arith.constant 0 : index
    %60 = vector.load %arg8[%c64, %c0_34] : memref<72x256xbf16, #tpu.memory_space<vmem>>, vector<8x256xbf16>
    tpu.vector_store %arg8[%c64, %c0_34], %59 {strides = array<i32>} : memref<72x256xbf16, #tpu.memory_space<vmem>>, vector<8x256xbf16>,
    %c0_35 = arith.constant 0 : index
    %c0_36 = arith.constant 0 : index
    %61 = vector.load %arg2[%c0_35, %c0_36] : memref<8x72xbf16, #tpu.memory_space<vmem>>, vector<8x72xbf16>
    %c0_37 = arith.constant 0 : index
    %c0_38 = arith.constant 0 : index
    %62 = vector.load %arg8[%c0_37, %c0_38] : memref<72x256xbf16, #tpu.memory_space<vmem>>, vector<72x256xbf16>
    %cst_39 = arith.constant dense<0.000000e+00> : vector<8x256xf32>
    %63 = tpu.matmul %61, %62, %cst_39 {dimension_numbers = #tpu.dot_dimension_numbers<[1], [0], [0], [1], [0, 0, 1, 1], [], []>} : vector<8x72xbf16>, vector<72x256xbf16>, vector<8x256xf32> -> vector<8x256xf32>
    %c0_40 = arith.constant 0 : index
    %c0_41 = arith.constant 0 : index
    %64 = vector.load %arg3[%c0_40, %c0_41] : memref<8x1xf32, #tpu.memory_space<vmem>>, vector<8x1xf32>
    %65 = vector.broadcast %64 : vector<8x1xf32> to vector<8x256xf32>
    %66 = arith.addf %63, %65 : vector<8x256xf32>
    %cst_42 = arith.constant 0.000000e+00 : f32
    %67 = vector.broadcast %cst_42 : f32 to vector<8x256xf32>
    %68 = arith.maximumf %66, %67 : vector<8x256xf32>
    %69 = arith.truncf %68 : vector<8x256xf32> to vector<8x256xbf16>
    %c0_43 = arith.constant 0 : index
    %c128_44 = arith.constant 128 : index
    %70 = vector.load %arg7[%c0_43, %c128_44] : memref<8x512xbf16, #tpu.memory_space<vmem>>, vector<8x256xbf16>
    tpu.vector_store %arg7[%c0_43, %c128_44], %69 {strides = array<i32>} : memref<8x512xbf16, #tpu.memory_space<vmem>>, vector<8x256xbf16>,
    %c0_45 = arith.constant 0 : index
    %c111_46 = arith.constant 111 : index
    %71 = vector.load %arg7[%c0_45, %c111_46] : memref<8x512xbf16, #tpu.memory_space<vmem>>, vector<8x256xbf16>
    %cst_47 = arith.constant 0.000000e+00 : bf16
    %72 = vector.broadcast %cst_47 : bf16 to vector<8x256xbf16>
    %73 = arith.select %20, %71, %72 : vector<8x256xi1>, vector<8x256xbf16>
    %c0_48 = arith.constant 0 : index
    %c0_49 = arith.constant 0 : index
    %74 = vector.load %arg8[%c0_48, %c0_49] : memref<72x256xbf16, #tpu.memory_space<vmem>>, vector<8x256xbf16>
    tpu.vector_store %arg8[%c0_48, %c0_49], %73 {strides = array<i32>} : memref<72x256xbf16, #tpu.memory_space<vmem>>, vector<8x256xbf16>,
    %c0_50 = arith.constant 0 : index
    %c112_51 = arith.constant 112 : index
    %75 = vector.load %arg7[%c0_50, %c112_51] : memref<8x512xbf16, #tpu.memory_space<vmem>>, vector<8x256xbf16>
    %c8_52 = arith.constant 8 : index
    %c0_53 = arith.constant 0 : index
    %76 = vector.load %arg8[%c8_52, %c0_53] : memref<72x256xbf16, #tpu.memory_space<vmem>>, vector<8x256xbf16>
    tpu.vector_store %arg8[%c8_52, %c0_53], %75 {strides = array<i32>} : memref<72x256xbf16, #tpu.memory_space<vmem>>, vector<8x256xbf16>,
    %c0_54 = arith.constant 0 : index
    %c113_55 = arith.constant 113 : index
    %77 = vector.load %arg7[%c0_54, %c113_55] : memref<8x512xbf16, #tpu.memory_space<vmem>>, vector<8x256xbf16>
    %cst_56 = arith.constant 0.000000e+00 : bf16
    %78 = vector.broadcast %cst_56 : bf16 to vector<8x256xbf16>
    %79 = arith.select %24, %77, %78 : vector<8x256xi1>, vector<8x256xbf16>
    %c16_57 = arith.constant 16 : index
    %c0_58 = arith.constant 0 : index
    %80 = vector.load %arg8[%c16_57, %c0_58] : memref<72x256xbf16, #tpu.memory_space<vmem>>, vector<8x256xbf16>
    tpu.vector_store %arg8[%c16_57, %c0_58], %79 {strides = array<i32>} : memref<72x256xbf16, #tpu.memory_space<vmem>>, vector<8x256xbf16>,
    %c0_59 = arith.constant 0 : index
    %c127_60 = arith.constant 127 : index
    %81 = vector.load %arg7[%c0_59, %c127_60] : memref<8x512xbf16, #tpu.memory_space<vmem>>, vector<8x256xbf16>
    %cst_61 = arith.constant 0.000000e+00 : bf16
    %82 = vector.broadcast %cst_61 : bf16 to vector<8x256xbf16>
    %83 = arith.select %20, %81, %82 : vector<8x256xi1>, vector<8x256xbf16>
    %c24_62 = arith.constant 24 : index
    %c0_63 = arith.constant 0 : index
    %84 = vector.load %arg8[%c24_62, %c0_63] : memref<72x256xbf16, #tpu.memory_space<vmem>>, vector<8x256xbf16>
    tpu.vector_store %arg8[%c24_62, %c0_63], %83 {strides = array<i32>} : memref<72x256xbf16, #tpu.memory_space<vmem>>, vector<8x256xbf16>,
    %c0_64 = arith.constant 0 : index
    %c128_65 = arith.constant 128 : index
    %85 = vector.load %arg7[%c0_64, %c128_65] : memref<8x512xbf16, #tpu.memory_space<vmem>>, vector<8x256xbf16>
    %c32_66 = arith.constant 32 : index
    %c0_67 = arith.constant 0 : index
    %86 = vector.load %arg8[%c32_66, %c0_67] : memref<72x256xbf16, #tpu.memory_space<vmem>>, vector<8x256xbf16>
    tpu.vector_store %arg8[%c32_66, %c0_67], %85 {strides = array<i32>} : memref<72x256xbf16, #tpu.memory_space<vmem>>, vector<8x256xbf16>,
    %c0_68 = arith.constant 0 : index
    %c129_69 = arith.constant 129 : index
    %87 = vector.load %arg7[%c0_68, %c129_69] : memref<8x512xbf16, #tpu.memory_space<vmem>>, vector<8x256xbf16>
    %cst_70 = arith.constant 0.000000e+00 : bf16
    %88 = vector.broadcast %cst_70 : bf16 to vector<8x256xbf16>
    %89 = arith.select %24, %87, %88 : vector<8x256xi1>, vector<8x256xbf16>
    %c40_71 = arith.constant 40 : index
    %c0_72 = arith.constant 0 : index
    %90 = vector.load %arg8[%c40_71, %c0_72] : memref<72x256xbf16, #tpu.memory_space<vmem>>, vector<8x256xbf16>
    tpu.vector_store %arg8[%c40_71, %c0_72], %89 {strides = array<i32>} : memref<72x256xbf16, #tpu.memory_space<vmem>>, vector<8x256xbf16>,
    %c0_73 = arith.constant 0 : index
    %c143_74 = arith.constant 143 : index
    %91 = vector.load %arg7[%c0_73, %c143_74] : memref<8x512xbf16, #tpu.memory_space<vmem>>, vector<8x256xbf16>
    %cst_75 = arith.constant 0.000000e+00 : bf16
    %92 = vector.broadcast %cst_75 : bf16 to vector<8x256xbf16>
    %93 = arith.select %20, %91, %92 : vector<8x256xi1>, vector<8x256xbf16>
    %c48_76 = arith.constant 48 : index
    %c0_77 = arith.constant 0 : index
    %94 = vector.load %arg8[%c48_76, %c0_77] : memref<72x256xbf16, #tpu.memory_space<vmem>>, vector<8x256xbf16>
    tpu.vector_store %arg8[%c48_76, %c0_77], %93 {strides = array<i32>} : memref<72x256xbf16, #tpu.memory_space<vmem>>, vector<8x256xbf16>,
    %c0_78 = arith.constant 0 : index
    %c144_79 = arith.constant 144 : index
    %95 = vector.load %arg7[%c0_78, %c144_79] : memref<8x512xbf16, #tpu.memory_space<vmem>>, vector<8x256xbf16>
    %c56_80 = arith.constant 56 : index
    %c0_81 = arith.constant 0 : index
    %96 = vector.load %arg8[%c56_80, %c0_81] : memref<72x256xbf16, #tpu.memory_space<vmem>>, vector<8x256xbf16>
    tpu.vector_store %arg8[%c56_80, %c0_81], %95 {strides = array<i32>} : memref<72x256xbf16, #tpu.memory_space<vmem>>, vector<8x256xbf16>,
    %c0_82 = arith.constant 0 : index
    %c145_83 = arith.constant 145 : index
    %97 = vector.load %arg7[%c0_82, %c145_83] : memref<8x512xbf16, #tpu.memory_space<vmem>>, vector<8x256xbf16>
    %cst_84 = arith.constant 0.000000e+00 : bf16
    %98 = vector.broadcast %cst_84 : bf16 to vector<8x256xbf16>
    %99 = arith.select %24, %97, %98 : vector<8x256xi1>, vector<8x256xbf16>
    %c64_85 = arith.constant 64 : index
    %c0_86 = arith.constant 0 : index
    %100 = vector.load %arg8[%c64_85, %c0_86] : memref<72x256xbf16, #tpu.memory_space<vmem>>, vector<8x256xbf16>
    tpu.vector_store %arg8[%c64_85, %c0_86], %99 {strides = array<i32>} : memref<72x256xbf16, #tpu.memory_space<vmem>>, vector<8x256xbf16>,
    %c0_87 = arith.constant 0 : index
    %c0_88 = arith.constant 0 : index
    %101 = vector.load %arg4[%c0_87, %c0_88] : memref<8x72xbf16, #tpu.memory_space<vmem>>, vector<8x72xbf16>
    %c0_89 = arith.constant 0 : index
    %c0_90 = arith.constant 0 : index
    %102 = vector.load %arg8[%c0_89, %c0_90] : memref<72x256xbf16, #tpu.memory_space<vmem>>, vector<72x256xbf16>
    %cst_91 = arith.constant dense<0.000000e+00> : vector<8x256xf32>
    %103 = tpu.matmul %101, %102, %cst_91 {dimension_numbers = #tpu.dot_dimension_numbers<[1], [0], [0], [1], [0, 0, 1, 1], [], []>} : vector<8x72xbf16>, vector<72x256xbf16>, vector<8x256xf32> -> vector<8x256xf32>
    %c0_92 = arith.constant 0 : index
    %c0_93 = arith.constant 0 : index
    %104 = vector.load %arg5[%c0_92, %c0_93] : memref<8x1xf32, #tpu.memory_space<vmem>>, vector<8x1xf32>
    %105 = vector.broadcast %104 : vector<8x1xf32> to vector<8x256xf32>
    %106 = arith.addf %103, %105 : vector<8x256xf32>
    %c0_94 = arith.constant 0 : index
    %c0_95 = arith.constant 0 : index
    %c0_96 = arith.constant 0 : index
    %107 = vector.load %arg1[%c0_94, %c0_95, %c0_96] : memref<1x8x256xf32, #tpu.memory_space<vmem>>, vector<1x8x256xf32>
    %108 = vector.shape_cast %107 : vector<1x8x256xf32> to vector<8x256xf32>
    %109 = arith.addf %106, %108 : vector<8x256xf32>
    %cst_97 = arith.constant 0.000000e+00 : f32
    %110 = vector.broadcast %cst_97 : f32 to vector<8x256xf32>
    %111 = arith.maximumf %109, %110 : vector<8x256xf32>
    %c0_98 = arith.constant 0 : index
    %c0_99 = arith.constant 0 : index
    %c0_100 = arith.constant 0 : index
    %112 = vector.load %arg6[%c0_98, %c0_99, %c0_100] : memref<1x8x256xf32, #tpu.memory_space<vmem>>, vector<1x8x256xf32>
    %113 = vector.shape_cast %112 : vector<1x8x256xf32> to vector<8x256xf32>
    %114 = vector.shape_cast %111 : vector<8x256xf32> to vector<1x8x256xf32>
    tpu.vector_store %arg6[%c0_98, %c0_99, %c0_100], %114 {strides = array<i32>} : memref<1x8x256xf32, #tpu.memory_space<vmem>>, vector<1x8x256xf32>,
    return
  }
  func.func @transform_0(%arg0: i32) -> (i32, i32, i32) {
    %c0_i32 = arith.constant 0 : i32
    %c0_i32_0 = arith.constant 0 : i32
    %c0_i32_1 = arith.constant 0 : i32
    return %arg0, %c0_i32, %c0_i32_0 : i32, i32, i32
  }
  func.func @transform_1(%arg0: i32) -> (i32, i32) {
    %c0_i32 = arith.constant 0 : i32
    %c0_i32_0 = arith.constant 0 : i32
    %c0_i32_1 = arith.constant 0 : i32
    return %c0_i32, %c0_i32_0 : i32, i32
  }
  func.func @transform_2(%arg0: i32) -> (i32, i32) {
    %c0_i32 = arith.constant 0 : i32
    %c0_i32_0 = arith.constant 0 : i32
    %c0_i32_1 = arith.constant 0 : i32
    return %c0_i32, %c0_i32_0 : i32, i32
  }
  func.func @transform_3(%arg0: i32) -> (i32, i32) {
    %c0_i32 = arith.constant 0 : i32
    %c0_i32_0 = arith.constant 0 : i32
    %c0_i32_1 = arith.constant 0 : i32
    return %c0_i32, %c0_i32_0 : i32, i32
  }
  func.func @transform_4(%arg0: i32) -> (i32, i32) {
    %c0_i32 = arith.constant 0 : i32
    %c0_i32_0 = arith.constant 0 : i32
    %c0_i32_1 = arith.constant 0 : i32
    return %c0_i32, %c0_i32_0 : i32, i32
  }
  func.func @transform_5(%arg0: i32) -> (i32, i32, i32) {
    %c0_i32 = arith.constant 0 : i32
    %c0_i32_0 = arith.constant 0 : i32
    %c0_i32_1 = arith.constant 0 : i32
    return %arg0, %c0_i32, %c0_i32_0 : i32, i32, i32
  }
}

</mosaic_0001>

<llo_original>
// kernel: basic_block_forward.1
$region0: #{basic_block_forward.1}
  #allocation0 [shape = 'u32[]', space=smem, size = 0x4, offset = 0x4, fixed_abs, tag = 'smem constant byte address 0x4 - core index']
  #allocation1 [shape = 'u32[144,128]{1,0:T(1,128)}', space=vmem, size = 0x12000, scoped, tag = 'internal scratch']
  #allocation2 [shape = 'bf16[8,512]{1,0:T(8,128)(2,1)}', space=vmem, size = 0x2000, scoped, tag = 'scratch operand']
  #allocation3 [shape = 'bf16[72,256]{1,0:T(8,128)(2,1)}', space=vmem, size = 0x9000, scoped, tag = 'scratch operand']
  %s0 = inlined_call_operand.vmem [shape: f32[2,8,256], index: 0, kind: input, shape index: {}]
  %s1 = inlined_call_operand.vmem [shape: bf16[8,72], index: 1, kind: input, shape index: {}]
  %s2 = inlined_call_operand.vmem [shape: f32[8,1], index: 2, kind: input, shape index: {}]
  %s3 = inlined_call_operand.vmem [shape: bf16[8,72], index: 3, kind: input, shape index: {}]
  %s4 = inlined_call_operand.vmem [shape: f32[8,1], index: 4, kind: input, shape index: {}]
  %s5 = inlined_call_operand.vmem [shape: f32[2,8,256], index: 5, kind: output, shape index: {}]
  %s6 = sld [smem:[#allocation0]]
  $region53: #{basic_block_forward.1} parent=0
    _
  %s8 = ssub.s32 1, %s6
  %s9 = scalar_select 0, %s8, %s6
  loop: start=0, step=1, limit=4
  $region2: #{basic_block_forward.1} parent=0 // loop_pre_header
    _
  $region3: #{basic_block_forward.1} parent=0 // loop_header
    %s11 = sphi 0, %s15
    %p12 = scmp.ge.s32.totalorder %s11, 4
    %s21 = sphi 0, %s23
    %s24 = sphi 0, %s21
    %s25 = sphi 0, %s24
    %s41 = sphi 0, %s25
    %s45 = sphi 0, %s45
    %s47 = sphi 0, %s45
    %s48 = sphi 0, %s47
    %s62 = sphi 0, %s48
    %s66 = sphi 0, %s66
    %s68 = sphi 0, %s66
    %s69 = sphi 0, %s68
    %s83 = sphi 0, %s69
    %s87 = sphi 0, %s87
    %s89 = sphi 0, %s87
    %s90 = sphi 0, %s89
    %s104 = sphi 0, %s90
    %s108 = sphi 0, %s108
    %s110 = sphi 0, %s108
    %s111 = sphi 0, %s110
    %s125 = sphi 0, %s111
    %s131 = sphi 0, %s133
    %s134 = sphi 0, %s131
    %s135 = sphi 0, %s134
    %s151 = sphi 0, %s135
  $region4: #{basic_block_forward.1} parent=0 // loop_header_branch
    %14 = sbr.rel (%p12) target = $region8
  $region5: #{basic_block_forward.1} parent=0 // loop_body
    %s16 = ssub.s32 %s11, 1
    %s17 = ssub.s32 %s11, 2
    %s18 = sadd.s32 %s11, 1
    %s19 = ssub.s32 %s11, %s18
    %p20 = scmp.eq.s32.totalorder %s19, 0
    %s22 = sadd.s32 %s21, 1
    %s23 = scalar_select %p20, %s21, %s22
    %p26 = pneg %p20
    %p27 = scmp.eq.s32.totalorder %s11, 1
    %p28 = por %p26, %p27
    %p29 = scmp.ne.s32.totalorder %s21, %s24
    %p30 = scmp.eq.s32.totalorder %s11, 0
    %p31 = por %p29, %p30
    %p32 = scmp.ne.s32.totalorder %s21, %s24
    %p33 = scmp.eq.s32.totalorder %s16, 1
    %p34 = por %p32, %p33
    %p35 = scmp.ne.s32.totalorder %s24, %s25
    %p36 = scmp.eq.s32.totalorder %s16, 0
    %p37 = por %p35, %p36
    %p38 = scmp.ne.s32.totalorder %s24, %s25
    %p39 = scmp.eq.s32.totalorder %s17, 1
    %p40 = por %p38, %p39
    %p42 = scmp.ne.s32.totalorder %s25, %s41
    %p43 = scmp.eq.s32.totalorder %s17, 0
    %p44 = por %p42, %p43
    %s46 = sadd.s32 %s45, 1
    %p49 = scmp.eq.s32.totalorder %s11, 1
    %p50 = scmp.ne.s32.totalorder %s45, %s47
    %p51 = scmp.eq.s32.totalorder %s11, 0
    %p52 = por %p50, %p51
    %p53 = scmp.ne.s32.totalorder %s45, %s47
    %p54 = scmp.eq.s32.totalorder %s16, 1
    %p55 = por %p53, %p54
    %p56 = scmp.ne.s32.totalorder %s47, %s48
    %p57 = scmp.eq.s32.totalorder %s16, 0
    %p58 = por %p56, %p57
    %p59 = scmp.ne.s32.totalorder %s47, %s48
    %p60 = scmp.eq.s32.totalorder %s17, 1
    %p61 = por %p59, %p60
    %p63 = scmp.ne.s32.totalorder %s48, %s62
    %p64 = scmp.eq.s32.totalorder %s17, 0
    %p65 = por %p63, %p64
    %s67 = sadd.s32 %s66, 1
    %p70 = scmp.eq.s32.totalorder %s11, 1
    %p71 = scmp.ne.s32.totalorder %s66, %s68
    %p72 = scmp.eq.s32.totalorder %s11, 0
    %p73 = por %p71, %p72
    %p74 = scmp.ne.s32.totalorder %s66, %s68
    %p75 = scmp.eq.s32.totalorder %s16, 1
    %p76 = por %p74, %p75
    %p77 = scmp.ne.s32.totalorder %s68, %s69
    %p78 = scmp.eq.s32.totalorder %s16, 0
    %p79 = por %p77, %p78
    %p80 = scmp.ne.s32.totalorder %s68, %s69
    %p81 = scmp.eq.s32.totalorder %s17, 1
    %p82 = por %p80, %p81
    %p84 = scmp.ne.s32.totalorder %s69, %s83
    %p85 = scmp.eq.s32.totalorder %s17, 0
    %p86 = por %p84, %p85
    %s88 = sadd.s32 %s87, 1
    %p91 = scmp.eq.s32.totalorder %s11, 1
    %p92 = scmp.ne.s32.totalorder %s87, %s89
    %p93 = scmp.eq.s32.totalorder %s11, 0
    %p94 = por %p92, %p93
    %p95 = scmp.ne.s32.totalorder %s87, %s89
    %p96 = scmp.eq.s32.totalorder %s16, 1
    %p97 = por %p95, %p96
    %p98 = scmp.ne.s32.totalorder %s89, %s90
    %p99 = scmp.eq.s32.totalorder %s16, 0
    %p100 = por %p98, %p99
    %p101 = scmp.ne.s32.totalorder %s89, %s90
    %p102 = scmp.eq.s32.totalorder %s17, 1
    %p103 = por %p101, %p102
    %p105 = scmp.ne.s32.totalorder %s90, %s104
    %p106 = scmp.eq.s32.totalorder %s17, 0
    %p107 = por %p105, %p106
    %s109 = sadd.s32 %s108, 1
    %p112 = scmp.eq.s32.totalorder %s11, 1
    %p113 = scmp.ne.s32.totalorder %s108, %s110
    %p114 = scmp.eq.s32.totalorder %s11, 0
    %p115 = por %p113, %p114
    %p116 = scmp.ne.s32.totalorder %s108, %s110
    %p117 = scmp.eq.s32.totalorder %s16, 1
    %p118 = por %p116, %p117
    %p119 = scmp.ne.s32.totalorder %s110, %s111
    %p120 = scmp.eq.s32.totalorder %s16, 0
    %p121 = por %p119, %p120
    %p122 = scmp.ne.s32.totalorder %s110, %s111
    %p123 = scmp.eq.s32.totalorder %s17, 1
    %p124 = por %p122, %p123
    %p126 = scmp.ne.s32.totalorder %s111, %s125
    %p127 = scmp.eq.s32.totalorder %s17, 0
    %p128 = por %p126, %p127
    %s129 = ssub.s32 %s11, %s18
    %p130 = scmp.eq.s32.totalorder %s129, 0
    %s132 = sadd.s32 %s131, 1
    %s133 = scalar_select %p130, %s131, %s132
    %p136 = pneg %p130
    %p137 = scmp.eq.s32.totalorder %s11, 1
    %p138 = por %p136, %p137
    %p139 = scmp.ne.s32.totalorder %s131, %s134
    %p140 = scmp.eq.s32.totalorder %s11, 0
    %p141 = por %p139, %p140
    %p142 = scmp.ne.s32.totalorder %s131, %s134
    %p143 = scmp.eq.s32.totalorder %s16, 1
    %p144 = por %p142, %p143
    %p145 = scmp.ne.s32.totalorder %s134, %s135
    %p146 = scmp.eq.s32.totalorder %s16, 0
    %p147 = por %p145, %p146
    %p148 = scmp.ne.s32.totalorder %s134, %s135
    %p149 = scmp.eq.s32.totalorder %s17, 1
    %p150 = por %p148, %p149
    %p152 = scmp.ne.s32.totalorder %s135, %s151
    %p153 = scmp.eq.s32.totalorder %s17, 0
    %p154 = por %p152, %p153
    %p155 = scmp.le.s32.totalorder 1, %s11
    %p156 = scmp.lt.s32.totalorder %s11, 3
    %p157 = pnand %p155, %p156
    %p158 = pneg %p157
    // Predicated region
    $region9: #{basic_block_forward.1} parent=5 // pred_check
      _
    $region10: #{basic_block_forward.1} parent=5 // pred_check_branch
      %160 = sbr.rel (%p157) target = $region12
    $region11: #{basic_block_forward.1} parent=5 // pred_region
      %s161 = ssub.s32 %s11, 1
      // Predicated region
      $region13: #{basic_block_forward.1} parent=11 // pred_check
        %p162 = pneg %p58
      $region14: #{basic_block_forward.1} parent=11 // pred_check_branch
        %164 = sbr.rel (%p162) target = $region16
      $region15: #{basic_block_forward.1} parent=11 // pred_region
        _
      $region16: #{basic_block_forward.1} parent=11 // pred_fallthru
        _
      // Predicated region
      $region17: #{basic_block_forward.1} parent=11 // pred_check
        %p165 = pneg %p79
      $region18: #{basic_block_forward.1} parent=11 // pred_check_branch
        %167 = sbr.rel (%p165) target = $region20
      $region19: #{basic_block_forward.1} parent=11 // pred_region
        _
      $region20: #{basic_block_forward.1} parent=11 // pred_fallthru
        _
      // Predicated region
      $region21: #{basic_block_forward.1} parent=11 // pred_check
        %p168 = pneg %p100
      $region22: #{basic_block_forward.1} parent=11 // pred_check_branch
        %170 = sbr.rel (%p168) target = $region24
      $region23: #{basic_block_forward.1} parent=11 // pred_region
        _
      $region24: #{basic_block_forward.1} parent=11 // pred_fallthru
        _
      // Predicated region
      $region25: #{basic_block_forward.1} parent=11 // pred_check
        %p171 = pneg %p121
      $region26: #{basic_block_forward.1} parent=11 // pred_check_branch
        %173 = sbr.rel (%p171) target = $region28
      $region27: #{basic_block_forward.1} parent=11 // pred_region
        _
      $region28: #{basic_block_forward.1} parent=11 // pred_fallthru
        _
    $region12: #{basic_block_forward.1} parent=5 // pred_fallthru
      _
    %p174 = scmp.lt.s32.totalorder %s11, 2
    // Predicated region
    $region29: #{basic_block_forward.1} parent=5 // pred_check
      %p175 = pneg %p174
    $region30: #{basic_block_forward.1} parent=5 // pred_check_branch
      %177 = sbr.rel (%p175) target = $region32
    $region31: #{basic_block_forward.1} parent=5 // pred_region
      // Predicated region
      $region33: #{basic_block_forward.1} parent=31 // pred_check
        %p178 = pneg %p31
      $region34: #{basic_block_forward.1} parent=31 // pred_check_branch
        %180 = sbr.rel (%p178) target = $region36
      $region35: #{basic_block_forward.1} parent=31 // pred_region
        %p181 = scmp.lt.s32.totalorder %s11, 1
        %s182 = scalar_select %p181, %s11, 1
        %s183 = smul.addr %s182, 2
        %s184 = smul.addr %s183, 8
        %s185 = scalar_lea.vmem %s0, %s184
      $region36: #{basic_block_forward.1} parent=31 // pred_fallthru
        _
    $region32: #{basic_block_forward.1} parent=5 // pred_fallthru
      _
    %p186 = scmp.le.s32.totalorder 1, %s11
    %p187 = scmp.lt.s32.totalorder %s11, 3
    %p188 = pnand %p186, %p187
    %p189 = pneg %p188
    // Predicated region
    $region37: #{basic_block_forward.1} parent=5 // pred_check
      _
    $region38: #{basic_block_forward.1} parent=5 // pred_check_branch
      %191 = sbr.rel (%p188) target = $region40
    $region39: #{basic_block_forward.1} parent=5 // pred_region
      %s192 = ssub.s32 %s11, 1
      %p193 = scmp.lt.s32.totalorder %s16, 1
      %s194 = scalar_select %p193, %s16, 1
      %s195 = smul.addr %s194, 2
      %s196 = smul.addr %s195, 8
      %s197 = scalar_lea.vmem %s0, %s196
      %p198 = pneg %p37
      %p199 = pneg %p34
      %p200 = pneg %p58
      %p201 = pneg %p55
      %p202 = pneg %p79
      %p203 = pneg %p76
      %p204 = pneg %p100
      %p205 = pneg %p97
      %p206 = pneg %p121
      %p207 = pneg %p118
      %p208 = pneg %p147
      %p209 = pneg %p144
      %p210 = scmp.lt.s32.totalorder %s16, 1
      %s211 = scalar_select %p210, %s16, 1
      %s212 = smul.addr %s211, 2
      %s213 = smul.addr %s212, 8
      %s214 = scalar_lea.vmem %s5, %s213
      %p215 = scmp.lt.s32.totalorder %s16, 1
      %s216 = scalar_select %p215, %s16, 1
      %s217 = smul.addr %s216, 2
      %s218 = smul.addr %s217, 8
      %s219 = scalar_lea.vmem %s0, %s218
      %p220 = scmp.lt.s32.totalorder %s16, 1
      %s221 = scalar_select %p220, %s16, 1
      %s222 = smul.addr %s221, 2
      %s223 = smul.addr %s222, 8
      %s224 = scalar_lea.vmem %s5, %s223
      %v228 = vlaneseq
      %v229 = vand.u32 %v228, 127
      %v230 = vadd.s32 %v229, 128
      %vm231 = vcmp.lt.s32.totalorder %v229, 0
      %v232 = vsub.s32 0, %v229
      %v233 = vsel %vm231, %v232, %v229
      %v234 = vshrl.u32 %v233, 4
      %v235 = vand.u32 %v233, 15
      %v236 = vsub.s32 0, %v235
      %v237 = vsel %vm231, %v236, %v235
      %vm238 = vcmp.lt.s32.totalorder %v230, 0
      %v239 = vsub.s32 0, %v230
      %v240 = vsel %vm238, %v239, %v230
      %v241 = vshrl.u32 %v240, 4
      %v242 = vand.u32 %v240, 15
      %v243 = vsub.s32 0, %v242
      %v244 = vsel %vm238, %v243, %v242
      %vm245 = vcmp.ne.s32.totalorder %v237, 0
      %vm246 = vcmp.ne.s32.totalorder %v244, 0
      %vm247 = vcmp.lt.s32.totalorder %v237, 0
      %vm248 = vcmp.lt.s32.totalorder %v244, 0
      %vm249 = vmand %vm247, %vm245
      %vm250 = vmand %vm248, %vm246
      %v251 = vadd.s32 %v237, 16
      %v252 = vadd.s32 %v244, 16
      %v253 = vsel %vm249, %v251, %v237
      %v254 = vsel %vm250, %v252, %v244
      %vm255 = vcmp.ne.s32.totalorder %v253, 0
      %vm256 = vcmp.ne.s32.totalorder %v254, 0
      %v257 = vsel %vm255, 1, 0
      %v258 = vsel %vm256, 1, 0
      %vm259 = vcmp.eq.s32.totalorder %v257, 1
      %vm260 = vcmp.eq.s32.totalorder %v258, 1
      %vm261 = vcmp.ne.s32.totalorder %v253, 15
      %vm262 = vcmp.ne.s32.totalorder %v254, 15
      %v263 = vsel %vm261, 1, 0
      %v264 = vsel %vm262, 1, 0
      %vm265 = vcmp.eq.s32.totalorder %v263, 1
      %vm266 = vcmp.eq.s32.totalorder %v264, 1
      %267 = vst [vmem:[#allocation2] sm:$0xff] 0
      %268 = vst [vmem:[#allocation2 + $0x8] sm:$0xff] 0
      %v269 = vld [vmem:[%s219] sm:$0xff]
      %v270 = vld [vmem:[%s219 + $0x8] sm:$0xff]
      %v271 = vpack.c.bf16 %v269, %v269
      %v272 = vpack.c.bf16 %v270, %v270
      %v275 = vunpack.c.l.b16 %v271
      %v276 = vunpack.c.l.b16 %v272
      %v277 = vpack.c.b16 %v276, %v275
      %279 = vst [vmem:[#allocation2 + $0x4] sm:$0xff] %v277
      %v280 = vld [vmem:[#allocation2] sm:$0xff]
      %v281 = vld [vmem:[#allocation2 + $0x8] sm:$0xf]
      %vm282 = vmpackc.low %vm260, %vm259
      %v283 = vsel %vm282, 65537, 0
      %284 = vrot.lane.b32.xlu0 %v283, 111
      %v285 = vpop.permute.xlu0 %284
      %v286 = vrot.slane %v285, 4
      %vm287 = vcmask 908288
      %v288 = vsel %vm287, %v286, %v285
      %vm289 = vcmp.ne.s16.totalorder %v288, 0
      %vm290 = vcmp.ne.s16.totalorder %v286, 0
      %v291 = vsel %vm289, %v280, 0
      %v292 = vsel %vm290, %v281, 0
      %295 = vrot.lane.b32.xlu0 %v291, 17
      %v296 = vpop.permute.xlu0 %295
      %297 = vrot.lane.b32.xlu0 %v292, 17
      %v298 = vpop.permute.xlu0 %297
      %v299 = vrot.slane %v296, 4
      %v300 = vrot.slane %v298, 4
      %vm301 = vcmask 1043456
      %v302 = vsel %vm301, %v299, %v300
      %vm303 = vcmask 138240
      %v304 = vsel %vm303, %v296, %v302
      %306 = vst [vmem:[#allocation3] sm:$0xff] %v304
      %v307 = vld [vmem:[#allocation2] sm:$0xff]
      %v308 = vld [vmem:[#allocation2 + $0x8] sm:$0xf]
      %311 = vrot.lane.b32.xlu0 %v307, 16
      %v312 = vpop.permute.xlu0 %311
      %313 = vrot.lane.b32.xlu0 %v308, 16
      %v314 = vpop.permute.xlu0 %313
      %v315 = vrot.slane %v312, 4
      %v316 = vrot.slane %v314, 4
      %v317 = vsel %vm301, %v315, %v316
      %vm318 = vcmask 130048
      %v319 = vsel %vm318, %v312, %v317
      %321 = vst [vmem:[#allocation3 + $0x8] sm:$0xff] %v319
      %v322 = vld [vmem:[#allocation2] sm:$0xff]
      %v323 = vld [vmem:[#allocation2 + $0x8] sm:$0xf]
      %vm324 = vmpackc.low %vm266, %vm265
      %v325 = vsel %vm324, 65537, 0
      %326 = vrot.lane.b32.xlu0 %v325, 113
      %v327 = vpop.permute.xlu0 %326
      %v328 = vrot.slane %v327, 4
      %vm329 = vcmask 924672
      %v330 = vsel %vm329, %v328, %v327
      %vm331 = vcmp.ne.s16.totalorder %v330, 0
      %vm332 = vcmp.ne.s16.totalorder %v328, 0
      %v333 = vsel %vm331, %v322, 0
      %v334 = vsel %vm332, %v323, 0
      %337 = vrot.lane.b32.xlu0 %v333, 15
      %v338 = vpop.permute.xlu0 %337
      %339 = vrot.lane.b32.xlu0 %v334, 15
      %v340 = vpop.permute.xlu0 %339
      %v341 = vrot.slane %v338, 4
      %v342 = vrot.slane %v340, 4
      %v343 = vsel %vm301, %v341, %v342
      %vm344 = vcmask 121856
      %v345 = vsel %vm344, %v338, %v343
      %347 = vst [vmem:[#allocation3 + $0x10] sm:$0xff] %v345
      %v348 = vld [vmem:[#allocation2] sm:$0xff]
      %v349 = vld [vmem:[#allocation2 + $0x8] sm:$0xf]
      %350 = vrot.lane.b32.xlu0 %v283, 127
      %v351 = vpop.permute.xlu0 %350
      %v352 = vrot.slane %v351, 4
      %vm353 = vcmask 1039360
      %v354 = vsel %vm353, %v352, %v351
      %vm355 = vcmp.ne.s16.totalorder %v354, 0
      %vm356 = vcmp.ne.s16.totalorder %v352, 0
      %v357 = vsel %vm355, %v348, 0
      %v358 = vsel %vm356, %v349, 0
      %361 = vrot.lane.b32.xlu0 %v357, 1
      %v362 = vpop.permute.xlu0 %361
      %363 = vrot.lane.b32.xlu0 %v358, 1
      %v364 = vpop.permute.xlu0 %363
      %v365 = vrot.slane %v362, 4
      %v366 = vrot.slane %v364, 4
      %v367 = vsel %vm301, %v365, %v366
      %vm368 = vcmask 7168
      %v369 = vsel %vm368, %v362, %v367
      %371 = vst [vmem:[#allocation3 + $0x18] sm:$0xff] %v369
      %v372 = vld [vmem:[#allocation2 + $0x4] sm:$0xff]
      %373 = vst [vmem:[#allocation3 + $0x20] sm:$0xff] %v372
      %v374 = vld [vmem:[#allocation2 + $0x4] sm:$0xff]
      %v375 = vld [vmem:[#allocation2 + $0xc] sm:$0xf]
      %376 = vrot.lane.b32.xlu0 %v325, 1
      %v377 = vpop.permute.xlu0 %376
      %v378 = vrot.slane %v377, 4
      %v379 = vsel %vm368, %v378, %v377
      %vm380 = vcmp.ne.s16.totalorder %v379, 0
      %vm381 = vcmp.ne.s16.totalorder %v378, 0
      %v382 = vsel %vm380, %v374, 0
      %v383 = vsel %vm381, %v375, 0
      %386 = vrot.lane.b32.xlu0 %v382, 127
      %v387 = vpop.permute.xlu0 %386
      %388 = vrot.lane.b32.xlu0 %v383, 127
      %v389 = vpop.permute.xlu0 %388
      %v390 = vrot.slane %v387, 4
      %v391 = vrot.slane %v389, 4
      %v392 = vsel %vm301, %v390, %v391
      %v393 = vsel %vm353, %v387, %v392
      %395 = vst [vmem:[#allocation3 + $0x28] sm:$0xff] %v393
      %v396 = vld [vmem:[#allocation2 + $0x4] sm:$0xff]
      %v397 = vld [vmem:[#allocation2 + $0xc] sm:$0xf]
      %398 = vrot.lane.b32.xlu0 %v283, 15
      %v399 = vpop.permute.xlu0 %398
      %v400 = vrot.slane %v399, 4
      %v401 = vsel %vm344, %v400, %v399
      %vm402 = vcmp.ne.s16.totalorder %v401, 0
      %vm403 = vcmp.ne.s16.totalorder %v400, 0
      %v404 = vsel %vm402, %v396, 0
      %v405 = vsel %vm403, %v397, 0
      %408 = vrot.lane.b32.xlu0 %v404, 113
      %v409 = vpop.permute.xlu0 %408
      %410 = vrot.lane.b32.xlu0 %v405, 113
      %v411 = vpop.permute.xlu0 %410
      %v412 = vrot.slane %v409, 4
      %v413 = vrot.slane %v411, 4
      %v414 = vsel %vm301, %v412, %v413
      %v415 = vsel %vm329, %v409, %v414
      %417 = vst [vmem:[#allocation3 + $0x30] sm:$0xff] %v415
      %v418 = vld [vmem:[#allocation2 + $0x4] sm:$0xff]
      %v419 = vld [vmem:[#allocation2 + $0xc] sm:$0xf]
      %422 = vrot.lane.b32.xlu0 %v418, 112
      %v423 = vpop.permute.xlu0 %422
      %424 = vrot.lane.b32.xlu0 %v419, 112
      %v425 = vpop.permute.xlu0 %424
      %v426 = vrot.slane %v423, 4
      %v427 = vrot.slane %v425, 4
      %v428 = vsel %vm301, %v426, %v427
      %vm429 = vcmask 916480
      %v430 = vsel %vm429, %v423, %v428
      %432 = vst [vmem:[#allocation3 + $0x38] sm:$0xff] %v430
      %v433 = vld [vmem:[#allocation2 + $0x4] sm:$0xff]
      %v434 = vld [vmem:[#allocation2 + $0xc] sm:$0xf]
      %435 = vrot.lane.b32.xlu0 %v325, 17
      %v436 = vpop.permute.xlu0 %435
      %v437 = vrot.slane %v436, 4
      %v438 = vsel %vm303, %v437, %v436
      %vm439 = vcmp.ne.s16.totalorder %v438, 0
      %vm440 = vcmp.ne.s16.totalorder %v437, 0
      %v441 = vsel %vm439, %v433, 0
      %v442 = vsel %vm440, %v434, 0
      %445 = vrot.lane.b32.xlu0 %v441, 111
      %v446 = vpop.permute.xlu0 %445
      %447 = vrot.lane.b32.xlu0 %v442, 111
      %v448 = vpop.permute.xlu0 %447
      %v449 = vrot.slane %v446, 4
      %v450 = vrot.slane %v448, 4
      %v451 = vsel %vm301, %v449, %v450
      %v452 = vsel %vm287, %v446, %v451
      %454 = vst [vmem:[#allocation3 + $0x40] sm:$0xff] %v452
      %v455 = vld [vmem:[%s1] sm:$0xf]
      %v456 = vld [vmem:[#allocation3] sm:$0xff]
      %v457 = vld [vmem:[#allocation3 + $0x8] sm:$0xff]
      %v458 = vld [vmem:[#allocation3 + $0x10] sm:$0xff]
      %v459 = vld [vmem:[#allocation3 + $0x18] sm:$0xff]
      %v460 = vld [vmem:[#allocation3 + $0x20] sm:$0xff]
      %v461 = vld [vmem:[#allocation3 + $0x28] sm:$0xff]
      %v462 = vld [vmem:[#allocation3 + $0x30] sm:$0xff]
      %v463 = vld [vmem:[#allocation3 + $0x38] sm:$0xff]
      %v464 = vld [vmem:[#allocation3 + $0x40] sm:$0xff]
      %v465 = vld [vmem:[%s2] sm:$0xff]
      %467 = vset.pattern.permute.xlu0 0
      %468 = vperm.xlu0 %467, %v465
      %v469 = vpop.permute.xlu0 %468
      %v480 = vunpack.c.l.b16 %v456
      %v481 = vunpack.c.h.b16 %v456
      %v482 = vunpack.c.l.b16 %v457
      %v483 = vunpack.c.h.b16 %v457
      %v484 = vunpack.c.l.b16 %v458
      %v485 = vunpack.c.h.b16 %v458
      %v486 = vunpack.c.l.b16 %v459
      %v487 = vunpack.c.h.b16 %v459
      %v488 = vunpack.c.l.b16 %v460
      %v489 = vunpack.c.h.b16 %v460
      %v490 = vunpack.c.l.b16 %v461
      %v491 = vunpack.c.h.b16 %v461
      %v492 = vunpack.c.l.b16 %v462
      %v493 = vunpack.c.h.b16 %v462
      %v494 = vunpack.c.l.b16 %v463
      %v495 = vunpack.c.h.b16 %v463
      %v496 = vunpack.c.l.b16 %v464
      %v497 = vunpack.c.h.b16 %v464
      %v498 = vpack.c.b16 %v482, %v480
      %v499 = vpack.c.b16 %v483, %v481
      %v500 = vpack.c.b16 %v486, %v484
      %v501 = vpack.c.b16 %v487, %v485
      %v502 = vpack.c.b16 %v490, %v488
      %v503 = vpack.c.b16 %v491, %v489
      %v504 = vpack.c.b16 %v494, %v492
      %v505 = vpack.c.b16 %v495, %v493
      %v506 = vpack.c.b16 %v496, %v496
      %v507 = vpack.c.b16 %v497, %v497
      %vm516 = vcmask 588800
      %v518 = vsel %vm516, %v455, 0
      %vm520 = vcmask 1043456
      %v522 = vsel %vm520, %v506, 0
      %v525 = vsel %vm520, %v507, 0
      %527 = vmatprep.subr.bf16.mxu0 0
      %528 = vmatpush1.bf16.msra.mxu0 0
      %529 = vmatprep.subr.bf16.mxu0 0
      %530 = vmatpush1.bf16.msra.mxu0 0
      %531 = vmatprep.subr.bf16.mxu0 0
      %532 = vmatpush1.bf16.msra.mxu0 0
      %533 = vmatprep.subr.bf16.mxu0 %v525
      %534 = vmatpush1.bf16.msra.mxu0 %v522
      %535 = vmatprep.subr.bf16.mxu0 %v505
      %536 = vmatpush1.bf16.msra.mxu0 %v504
      %537 = vmatprep.subr.bf16.mxu0 %v503
      %538 = vmatpush1.bf16.msra.mxu0 %v502
      %539 = vmatprep.subr.bf16.mxu0 %v501
      %540 = vmatpush1.bf16.msra.mxu0 %v500
      %541 = vmatprep.subr.bf16.mxu0 %v499
      %542 = vmatpush1.bf16.msra.mxu0 %v498
      %543 = vmatprep.subr.bf16.mxu0 0
      %544 = vmatpush2.bf16.msra.mxu0 0
      %545 = vmatprep.subr.bf16.mxu0 0
      %546 = vmatpush2.bf16.msra.mxu0 0
      %547 = vmatprep.subr.bf16.mxu0 0
      %548 = vmatpush2.bf16.msra.mxu0 0
      %549 = vmatprep.subr.bf16.mxu0 0
      %550 = vmatpush2.bf16.msra.mxu0 0
      %551 = vmatprep.subr.bf16.mxu0 0
      %552 = vmatpush2.bf16.msra.mxu0 0
      %553 = vmatprep.subr.bf16.mxu0 0
      %554 = vmatpush2.bf16.msra.mxu0 0
      %555 = vmatprep.subr.bf16.mxu0 0
      %556 = vmatpush2.bf16.msra.mxu0 0
      %557 = vmatprep.subr.bf16.mxu0 0
      %558 = vmatpush2.bf16.msra.mxu0 0
      %559 = vmatprep.mubr.bf16.mxu0 0
      %560 = vmatmul.mubr.bf16.gmra.mxu0 %v518
      %v561 = vpop.f32.mrf.mxu0
      %v562 = vadd.f32 %v469, %v561
      %v563 = vpop.f32.mrf.mxu0
      %v564 = vadd.f32 %v469, %v563
      %v565 = vpop.f32.mrf.mxu0
      %v566 = vpop.f32.mrf.mxu0
      %567 = vdwg.mxu0
      %v568 = vmax.f32 %v562, 0.0
      %v569 = vmax.f32 %v564, 0.0
      %v570 = vpack.c.bf16 %v568, %v568
      %v571 = vpack.c.bf16 %v569, %v569
      %v574 = vunpack.c.l.b16 %v570
      %v575 = vunpack.c.l.b16 %v571
      %v576 = vpack.c.b16 %v575, %v574
      %578 = vst [vmem:[#allocation2 + $0x4] sm:$0xff] %v576
      %v579 = vld [vmem:[#allocation2] sm:$0xff]
      %v580 = vld [vmem:[#allocation2 + $0x8] sm:$0xf]
      %v581 = vsel %vm289, %v579, 0
      %v582 = vsel %vm290, %v580, 0
      %585 = vrot.lane.b32.xlu0 %v581, 17
      %v586 = vpop.permute.xlu0 %585
      %587 = vrot.lane.b32.xlu0 %v582, 17
      %v588 = vpop.permute.xlu0 %587
      %v589 = vrot.slane %v586, 4
      %v590 = vrot.slane %v588, 4
      %v591 = vsel %vm301, %v589, %v590
      %v592 = vsel %vm303, %v586, %v591
      %594 = vst [vmem:[#allocation3] sm:$0xff] %v592
      %v595 = vld [vmem:[#allocation2] sm:$0xff]
      %v596 = vld [vmem:[#allocation2 + $0x8] sm:$0xf]
      %599 = vrot.lane.b32.xlu0 %v595, 16
      %v600 = vpop.permute.xlu0 %599
      %601 = vrot.lane.b32.xlu0 %v596, 16
      %v602 = vpop.permute.xlu0 %601
      %v603 = vrot.slane %v600, 4
      %v604 = vrot.slane %v602, 4
      %v605 = vsel %vm301, %v603, %v604
      %v606 = vsel %vm318, %v600, %v605
      %608 = vst [vmem:[#allocation3 + $0x8] sm:$0xff] %v606
      %v609 = vld [vmem:[#allocation2] sm:$0xff]
      %v610 = vld [vmem:[#allocation2 + $0x8] sm:$0xf]
      %v611 = vsel %vm331, %v609, 0
      %v612 = vsel %vm332, %v610, 0
      %615 = vrot.lane.b32.xlu0 %v611, 15
      %v616 = vpop.permute.xlu0 %615
      %617 = vrot.lane.b32.xlu0 %v612, 15
      %v618 = vpop.permute.xlu0 %617
      %v619 = vrot.slane %v616, 4
      %v620 = vrot.slane %v618, 4
      %v621 = vsel %vm301, %v619, %v620
      %v622 = vsel %vm344, %v616, %v621
      %624 = vst [vmem:[#allocation3 + $0x10] sm:$0xff] %v622
      %v625 = vld [vmem:[#allocation2] sm:$0xff]
      %v626 = vld [vmem:[#allocation2 + $0x8] sm:$0xf]
      %v627 = vsel %vm355, %v625, 0
      %v628 = vsel %vm356, %v626, 0
      %631 = vrot.lane.b32.xlu0 %v627, 1
      %v632 = vpop.permute.xlu0 %631
      %633 = vrot.lane.b32.xlu0 %v628, 1
      %v634 = vpop.permute.xlu0 %633
      %v635 = vrot.slane %v632, 4
      %v636 = vrot.slane %v634, 4
      %v637 = vsel %vm301, %v635, %v636
      %v638 = vsel %vm368, %v632, %v637
      %640 = vst [vmem:[#allocation3 + $0x18] sm:$0xff] %v638
      %v641 = vld [vmem:[#allocation2 + $0x4] sm:$0xff]
      %642 = vst [vmem:[#allocation3 + $0x20] sm:$0xff] %v641
      %v643 = vld [vmem:[#allocation2 + $0x4] sm:$0xff]
      %v644 = vld [vmem:[#allocation2 + $0xc] sm:$0xf]
      %v645 = vsel %vm380, %v643, 0
      %v646 = vsel %vm381, %v644, 0
      %649 = vrot.lane.b32.xlu0 %v645, 127
      %v650 = vpop.permute.xlu0 %649
      %651 = vrot.lane.b32.xlu0 %v646, 127
      %v652 = vpop.permute.xlu0 %651
      %v653 = vrot.slane %v650, 4
      %v654 = vrot.slane %v652, 4
      %v655 = vsel %vm301, %v653, %v654
      %v656 = vsel %vm353, %v650, %v655
      %658 = vst [vmem:[#allocation3 + $0x28] sm:$0xff] %v656
      %v659 = vld [vmem:[#allocation2 + $0x4] sm:$0xff]
      %v660 = vld [vmem:[#allocation2 + $0xc] sm:$0xf]
      %v661 = vsel %vm402, %v659, 0
      %v662 = vsel %vm403, %v660, 0
      %665 = vrot.lane.b32.xlu0 %v661, 113
      %v666 = vpop.permute.xlu0 %665
      %667 = vrot.lane.b32.xlu0 %v662, 113
      %v668 = vpop.permute.xlu0 %667
      %v669 = vrot.slane %v666, 4
      %v670 = vrot.slane %v668, 4
      %v671 = vsel %vm301, %v669, %v670
      %v672 = vsel %vm329, %v666, %v671
      %674 = vst [vmem:[#allocation3 + $0x30] sm:$0xff] %v672
      %v675 = vld [vmem:[#allocation2 + $0x4] sm:$0xff]
      %v676 = vld [vmem:[#allocation2 + $0xc] sm:$0xf]
      %679 = vrot.lane.b32.xlu0 %v675, 112
      %v680 = vpop.permute.xlu0 %679
      %681 = vrot.lane.b32.xlu0 %v676, 112
      %v682 = vpop.permute.xlu0 %681
      %v683 = vrot.slane %v680, 4
      %v684 = vrot.slane %v682, 4
      %v685 = vsel %vm301, %v683, %v684
      %v686 = vsel %vm429, %v680, %v685
      %688 = vst [vmem:[#allocation3 + $0x38] sm:$0xff] %v686
      %v689 = vld [vmem:[#allocation2 + $0x4] sm:$0xff]
      %v690 = vld [vmem:[#allocation2 + $0xc] sm:$0xf]
      %v691 = vsel %vm439, %v689, 0
      %v692 = vsel %vm440, %v690, 0
      %695 = vrot.lane.b32.xlu0 %v691, 111
      %v696 = vpop.permute.xlu0 %695
      %697 = vrot.lane.b32.xlu0 %v692, 111
      %v698 = vpop.permute.xlu0 %697
      %v699 = vrot.slane %v696, 4
      %v700 = vrot.slane %v698, 4
      %v701 = vsel %vm301, %v699, %v700
      %v702 = vsel %vm287, %v696, %v701
      %704 = vst [vmem:[#allocation3 + $0x40] sm:$0xff] %v702
      %v705 = vld [vmem:[%s3] sm:$0xf]
      %v706 = vld [vmem:[#allocation3] sm:$0xff]
      %v707 = vld [vmem:[#allocation3 + $0x8] sm:$0xff]
      %v708 = vld [vmem:[#allocation3 + $0x10] sm:$0xff]
      %v709 = vld [vmem:[#allocation3 + $0x18] sm:$0xff]
      %v710 = vld [vmem:[#allocation3 + $0x20] sm:$0xff]
      %v711 = vld [vmem:[#allocation3 + $0x28] sm:$0xff]
      %v712 = vld [vmem:[#allocation3 + $0x30] sm:$0xff]
      %v713 = vld [vmem:[#allocation3 + $0x38] sm:$0xff]
      %v714 = vld [vmem:[#allocation3 + $0x40] sm:$0xff]
      %v715 = vld [vmem:[%s4] sm:$0xff]
      %717 = vset.pattern.permute.xlu0 0
      %718 = vperm.xlu0 %717, %v715
      %v719 = vpop.permute.xlu0 %718
      %v730 = vunpack.c.l.b16 %v706
      %v731 = vunpack.c.h.b16 %v706
      %v732 = vunpack.c.l.b16 %v707
      %v733 = vunpack.c.h.b16 %v707
      %v734 = vunpack.c.l.b16 %v708
      %v735 = vunpack.c.h.b16 %v708
      %v736 = vunpack.c.l.b16 %v709
      %v737 = vunpack.c.h.b16 %v709
      %v738 = vunpack.c.l.b16 %v710
      %v739 = vunpack.c.h.b16 %v710
      %v740 = vunpack.c.l.b16 %v711
      %v741 = vunpack.c.h.b16 %v711
      %v742 = vunpack.c.l.b16 %v712
      %v743 = vunpack.c.h.b16 %v712
      %v744 = vunpack.c.l.b16 %v713
      %v745 = vunpack.c.h.b16 %v713
      %v746 = vunpack.c.l.b16 %v714
      %v747 = vunpack.c.h.b16 %v714
      %v748 = vpack.c.b16 %v732, %v730
      %v749 = vpack.c.b16 %v733, %v731
      %v750 = vpack.c.b16 %v736, %v734
      %v751 = vpack.c.b16 %v737, %v735
      %v752 = vpack.c.b16 %v740, %v738
      %v753 = vpack.c.b16 %v741, %v739
      %v754 = vpack.c.b16 %v744, %v742
      %v755 = vpack.c.b16 %v745, %v743
      %v756 = vpack.c.b16 %v746, %v746
      %v757 = vpack.c.b16 %v747, %v747
      %v767 = vsel %vm516, %v705, 0
      %v770 = vsel %vm520, %v756, 0
      %v773 = vsel %vm520, %v757, 0
      %775 = vmatprep.subr.bf16.mxu0 0
      %776 = vmatpush1.bf16.msra.mxu0 0
      %777 = vmatprep.subr.bf16.mxu0 0
      %778 = vmatpush1.bf16.msra.mxu0 0
      %779 = vmatprep.subr.bf16.mxu0 0
      %780 = vmatpush1.bf16.msra.mxu0 0
      %781 = vmatprep.subr.bf16.mxu0 %v773
      %782 = vmatpush1.bf16.msra.mxu0 %v770
      %783 = vmatprep.subr.bf16.mxu0 %v755
      %784 = vmatpush1.bf16.msra.mxu0 %v754
      %785 = vmatprep.subr.bf16.mxu0 %v753
      %786 = vmatpush1.bf16.msra.mxu0 %v752
      %787 = vmatprep.subr.bf16.mxu0 %v751
      %788 = vmatpush1.bf16.msra.mxu0 %v750
      %789 = vmatprep.subr.bf16.mxu0 %v749
      %790 = vmatpush1.bf16.msra.mxu0 %v748
      %791 = vmatprep.subr.bf16.mxu0 0
      %792 = vmatpush2.bf16.msra.mxu0 0
      %793 = vmatprep.subr.bf16.mxu0 0
      %794 = vmatpush2.bf16.msra.mxu0 0
      %795 = vmatprep.subr.bf16.mxu0 0
      %796 = vmatpush2.bf16.msra.mxu0 0
      %797 = vmatprep.subr.bf16.mxu0 0
      %798 = vmatpush2.bf16.msra.mxu0 0
      %799 = vmatprep.subr.bf16.mxu0 0
      %800 = vmatpush2.bf16.msra.mxu0 0
      %801 = vmatprep.subr.bf16.mxu0 0
      %802 = vmatpush2.bf16.msra.mxu0 0
      %803 = vmatprep.subr.bf16.mxu0 0
      %804 = vmatpush2.bf16.msra.mxu0 0
      %805 = vmatprep.subr.bf16.mxu0 0
      %806 = vmatpush2.bf16.msra.mxu0 0
      %807 = vmatprep.mubr.bf16.mxu0 0
      %808 = vmatmul.mubr.bf16.gmra.mxu0 %v767
      %v809 = vpop.f32.mrf.mxu0
      %v810 = vadd.f32 %v719, %v809
      %v811 = vpop.f32.mrf.mxu0
      %v812 = vadd.f32 %v719, %v811
      %v813 = vpop.f32.mrf.mxu0
      %v814 = vpop.f32.mrf.mxu0
      %815 = vdwg.mxu0
      %v816 = vld [vmem:[%s219] sm:$0xff]
      %v817 = vld [vmem:[%s219 + $0x8] sm:$0xff]
      %v818 = vadd.f32 %v810, %v816
      %v819 = vadd.f32 %v812, %v817
      %v820 = vmax.f32 %v818, 0.0
      %v821 = vmax.f32 %v819, 0.0
      %822 = vst [vmem:[%s224] sm:$0xff] %v820
      %823 = vst [vmem:[%s224 + $0x8] sm:$0xff] %v821
      %p824 = scmp.lt.s32.totalorder %s16, 1
      %s825 = scalar_select %p824, %s16, 1
      %s826 = smul.addr %s825, 2
      %s827 = smul.addr %s826, 8
      %s828 = scalar_lea.vmem %s5, %s827
      // Predicated region
      $region41: #{basic_block_forward.1} parent=39 // pred_check
        %p829 = pneg %p144
      $region42: #{basic_block_forward.1} parent=39 // pred_check_branch
        %831 = sbr.rel (%p829) target = $region44
      $region43: #{basic_block_forward.1} parent=39 // pred_region
        _
      $region44: #{basic_block_forward.1} parent=39 // pred_fallthru
        _
    $region40: #{basic_block_forward.1} parent=5 // pred_fallthru
      _
    %p832 = scmp.le.s32.totalorder 2, %s11
    // Predicated region
    $region45: #{basic_block_forward.1} parent=5 // pred_check
      %p833 = pneg %p832
    $region46: #{basic_block_forward.1} parent=5 // pred_check_branch
      %835 = sbr.rel (%p833) target = $region48
    $region47: #{basic_block_forward.1} parent=5 // pred_region
      %s836 = ssub.s32 %s11, 2
      // Predicated region
      $region49: #{basic_block_forward.1} parent=47 // pred_check
        %p837 = pneg %p150
      $region50: #{basic_block_forward.1} parent=47 // pred_check_branch
        %839 = sbr.rel (%p837) target = $region52
      $region51: #{basic_block_forward.1} parent=47 // pred_region
        %p840 = scmp.lt.s32.totalorder %s17, 1
        %s841 = scalar_select %p840, %s17, 1
        %s842 = smul.addr %s841, 2
        %s843 = smul.addr %s842, 8
        %s844 = scalar_lea.vmem %s5, %s843
      $region52: #{basic_block_forward.1} parent=47 // pred_fallthru
        _
    $region48: #{basic_block_forward.1} parent=5 // pred_fallthru
      _
  $region6: #{basic_block_forward.1} parent=0 // loop_footer
    %s15 = sadd.s32 1, %s11
  $region7: #{basic_block_forward.1} parent=0 // loop_footer_branch
    %10 = sbr.rel target = $region3
  $region8: #{basic_block_forward.1} parent=0 // loop_exit
    _

</llo_original>
